<compile_context>
chip_gen: v7x
topology: tpu7x:2x2x1
jax: 0.10.0
libtpu: 0.0.40
codegen_flags: <defaults>
</compile_context>

<pallas_src>
import jax
import jax.numpy as jnp
from jax.experimental import pallas as pl
from jax.experimental.pallas import tpu as pltpu

HIDDEN = 768          # implied by nn.Linear(768 * 2, 768)
VOCAB = 32
DROPOUT_P = 0.5


def _round_up(x, m):
    return ((x + m - 1) // m) * m


# ----------------------------------------------------------------------------
# Pallas kernel: fused masked sum (+ final scale = dropout/denominator)
# ----------------------------------------------------------------------------
def _masked_mean_dropout_kernel(emb_ref, mask_ref, scale_ref, out_ref):
    """Grid = (batch_tile, seq_tile); seq is the reduction axis (last, arbitrary).

    emb_ref  : (TB, TS, H)  token-embedding tile (bf16 or f32)
    mask_ref : (TB, TS, 1)  attention-mask tile, same dtype as emb (0/1 exact)
    scale_ref: (TB, H) f32  dropout_keep/(1-p) * 1/clamp(mask_sum, 1e-9)
    out_ref  : (TB, H) f32  resident accumulator (block invariant across seq)
    """
    s_idx = pl.program_id(1)

    @pl.when(s_idx == 0)
    def _init():
        out_ref[...] = jnp.zeros_like(out_ref)

    ts = emb_ref.shape[1]
    sub = min(ts, 128)
    # Static sub-chunk loop: multiply in the input dtype (0/1 mask is exact in
    # bf16), upcast only the (TB, sub, H) product to f32 for the reduce, so no
    # full-tile f32 temporary is materialized even at TS=1024.
    for off in range(0, ts, sub):
        sz = min(sub, ts - off)
        e = emb_ref[:, pl.ds(off, sz), :]            # (TB, sz, H)
        m = mask_ref[:, pl.ds(off, sz), :]           # (TB, sz, 1), same dtype
        out_ref[...] += jnp.sum((e * m).astype(jnp.float32), axis=1)

    @pl.when(s_idx == pl.num_programs(1) - 1)
    def _finalize():
        # scale folds both torch.clamp(mask_sum, 1e-9) reciprocal and the
        # dropout keep/(1-p) factor (precomputed host-side).
        out_ref[...] = out_ref[...] * scale_ref[...]


def masked_mean_pool_dropout(token_embeddings, attention_mask, dropout_mask):
    """One pooling in one pallas_call.

    token_embeddings: (B, S, H) float (bf16 or f32)
    attention_mask  : (B, S)    int/float
    dropout_mask    : (B, H)    float (0 or 1/(1-p); ones for eval)
    returns         : (B, H)    float32
    """
    B, S, H = token_embeddings.shape
    emb = token_embeddings
    itemsize = jnp.dtype(emb.dtype).itemsize

    # Fold 1/clamp(mask.sum(1), 1e-9) into the dropout mask: a tiny host-side
    # reduce; removes denominator scratch, clamp and divide from the kernel.
    denom = jnp.maximum(attention_mask.astype(jnp.float32).sum(axis=1), 1e-9)
    scale = dropout_mask.astype(jnp.float32) * (1.0 / denom)[:, None]   # (B,H)

    # Mask as (B,S,1) in the embedding dtype (0/1 exact in bf16) so the
    # in-kernel product stays in the narrow dtype (no full-tile f32 temp).
    mask3 = attention_mask.astype(emb.dtype)[..., None]                 # (B,S,1)

    # --- tile sizes (big seq tiles amortize the ~0.35us per-step overhead) ---
    ts_cap = 1024 if itemsize <= 2 else 512     # ~12.6 MiB / buffer at TB=8
    TB = 8 if B >= 8 else B
    B_pad = _round_up(B, TB)
    S8 = _round_up(S, 8)
    TS = S8 if S8 <= ts_cap else ts_cap
    S_pad = _round_up(S8, TS)

    if (B_pad, S_pad) != (B, S):
        # TODO(synk): padding copies the embedding slab; have the encoder emit
        # already-padded outputs on odd shapes to avoid this copy.
        emb = jnp.pad(emb, ((0, B_pad - B), (0, S_pad - S), (0, 0)))
        mask3 = jnp.pad(mask3, ((0, B_pad - B), (0, S_pad - S), (0, 0)))
        scale = jnp.pad(scale, ((0, B_pad - B), (0, 0)))

    grid = (B_pad // TB, S_pad // TS)           # reduction (seq) axis last

    # VMEM budget: 2 emb buffers + 2 (lane-padded) mask buffers + streaming
    # f32 sub-chunk temporaries + out/scale blocks + headroom, capped below
    # v7x's 64 MiB physical VMEM.
    sub = min(TS, 128)
    need = (2 * TB * TS * H * itemsize          # double-buffered emb tiles
            + 2 * TB * TS * 128 * itemsize      # lane-padded mask tiles
            + 3 * TB * sub * H * 4              # sub-chunk f32 temporaries
            + 4 * TB * H * 4                    # out + scale blocks
            + (4 << 20))                        # headroom
    vmem_limit = int(min(max(need, 32 << 20), 56 << 20))

    cost = pl.CostEstimate(
        flops=2 * B_pad * S_pad * H,
        transcendentals=0,
        bytes_accessed=(B_pad * S_pad * H * itemsize
                        + B_pad * S_pad * itemsize
                        + 2 * B_pad * H * 4))

    out = pl.pallas_call(
        _masked_mean_dropout_kernel,
        out_shape=jax.ShapeDtypeStruct((B_pad, H), jnp.float32),
        grid=grid,
        in_specs=[
            pl.BlockSpec((TB, TS, H), lambda b, s: (b, s, 0)),
            pl.BlockSpec((TB, TS, 1), lambda b, s: (b, s, 0)),
            pl.BlockSpec((TB, H),     lambda b, s: (b, 0)),
        ],
        out_specs=pl.BlockSpec((TB, H), lambda b, s: (b, 0)),
        compiler_params=pltpu.CompilerParams(
            dimension_semantics=("parallel", "arbitrary"),
            vmem_limit_bytes=vmem_limit),
        cost_estimate=cost,
    )(emb, mask3, scale)

    return out[:B]


# ----------------------------------------------------------------------------
# Dropout mask (host-side PRNG so the kernel stays interpret-mode compatible)
# ----------------------------------------------------------------------------
def _dropout_mask(key, shape, p, training):
    # nn.Dropout(p): no-op in eval; in training zero with prob p, scale 1/(1-p).
    if (not training) or p == 0.0:
        return jnp.ones(shape, jnp.float32)
    keep = jax.random.bernoulli(key, 1.0 - p, shape)
    return keep.astype(jnp.float32) * (1.0 / (1.0 - p))


# ----------------------------------------------------------------------------
# Deterministic parameter / encoder-stub setup (glue)
# ----------------------------------------------------------------------------
# TODO(synk): feature_encoder / encoder are external (HF transformer) modules;
# they are stubbed as deterministic bf16 embedding-table lookups producing
# model_output[0] of shape (B, S, 768).
def make_params(key):
    k_fe, k_en, k_lin_w, k_lin_b, k_fc_w, k_fc_b = jax.random.split(key, 6)
    return {
        "feature_encoder_emb": (jax.random.normal(k_fe, (VOCAB, HIDDEN),
                                                  jnp.float32) * 0.02
                                ).astype(jnp.bfloat16),
        "encoder_emb": (jax.random.normal(k_en, (VOCAB, HIDDEN),
                                          jnp.float32) * 0.02
                        ).astype(jnp.bfloat16),
        # Defined in __init__ but unused in forward (kept for shape fidelity):
        "linear_w": jax.random.normal(k_lin_w, (HIDDEN, 2 * HIDDEN),
                                      jnp.float32) * 0.02,
        "linear_b": jnp.zeros((HIDDEN,), jnp.float32),
        "fc_w": jax.random.normal(k_fc_w, (1, HIDDEN), jnp.float32) * 0.02,
        "fc_b": jnp.zeros((1,), jnp.float32),
    }


def encoder_stub(emb_table, input_ids, attention_mask):
    # Tuple so that model_output[0] is the token-embedding tensor, mirroring
    # the HF output convention consumed by mean_pooling.
    del attention_mask
    return (emb_table[input_ids],)


def my_model_forward(params, input_ids, attention_mask,
                     query_input_ids, query_attention_mask,
                     *, dropout_key, training=True):
    # output = self.feature_encoder(query_input_ids, query_attention_mask)
    q_out = encoder_stub(params["feature_encoder_emb"],
                         query_input_ids, query_attention_mask)
    # self.encoder(input_ids, attention_mask)
    s_out = encoder_stub(params["encoder_emb"], input_ids, attention_mask)

    kq, ks = jax.random.split(dropout_key)
    Bq, _, Hq = q_out[0].shape
    Bs, _, Hs = s_out[0].shape

    # Two independent pallas_calls (no (2,B,S,H) stacking copy); this also
    # allows query / sentence sequence lengths to differ.
    feature = masked_mean_pool_dropout(
        q_out[0], query_attention_mask,
        _dropout_mask(kq, (Bq, Hq), DROPOUT_P, training))
    sentence_embeddings = masked_mean_pool_dropout(
        s_out[0], attention_mask,
        _dropout_mask(ks, (Bs, Hs), DROPOUT_P, training))
    return feature, sentence_embeddings


# ----------------------------------------------------------------------------
if __name__ == "__main__":
    key = jax.random.PRNGKey(0)
    k_params, k_ids, k_qids, k_drop = jax.random.split(key, 4)

    B, S = 2, 8
    params = make_params(k_params)

    input_ids = jax.random.randint(k_ids, (B, S), 0, VOCAB, dtype=jnp.int32)
    query_input_ids = jax.random.randint(k_qids, (B, S), 0, VOCAB,
                                         dtype=jnp.int32)
    # masks: first row fully valid, second row has trailing padding
    attention_mask = jnp.array(
        [[1] * S, [1] * (S - 3) + [0] * 3], dtype=jnp.int32)
    query_attention_mask = jnp.array(
        [[1] * (S - 2) + [0] * 2, [1] * S], dtype=jnp.int32)

    feature, sentence_embeddings = my_model_forward(
        params, input_ids, attention_mask, query_input_ids,
        query_attention_mask, dropout_key=k_drop, training=True)

    jax.block_until_ready((feature, sentence_embeddings))
    assert feature.shape == (B, HIDDEN)
    assert sentence_embeddings.shape == (B, HIDDEN)
    assert bool(jnp.all(jnp.isfinite(feature)))
    assert bool(jnp.all(jnp.isfinite(sentence_embeddings)))
    print("KERNEL_OK")
</pallas_src>

<mosaic_0001>
module attributes {stable_mosaic.version = 11 : i64} {
  func.func @_masked_mean_dropout_kernel(%arg0: i32, %arg1: i32, %arg2: memref<2x8x768xbf16, #tpu.memory_space<vmem>>, %arg3: memref<2x8x1xbf16, #tpu.memory_space<vmem>>, %arg4: memref<2x768xf32, #tpu.memory_space<vmem>>, %arg5: memref<2x768xf32, #tpu.memory_space<vmem>>) attributes {dimension_semantics = [#tpu.dimension_semantics<parallel>, #tpu.dimension_semantics<arbitrary>], iteration_bounds = array<i64: 1, 1>, scalar_prefetch = 0 : i64, scratch_operands = 0 : i64, tpu.core_type = #tpu.core_type<tc>, window_params = [{transform_indices = @transform_0, window_bounds = array<i64: 2, 8, 768>}, {transform_indices = @transform_1, window_bounds = array<i64: 2, 8, 1>}, {transform_indices = @transform_2, window_bounds = array<i64: 2, 768>}, {transform_indices = @transform_3, window_bounds = array<i64: 2, 768>}]} {
    %c0_i32 = arith.constant 0 : i32
    %0 = arith.cmpi eq, %arg1, %c0_i32 : i32
    %1 = arith.extui %0 : i1 to i32
    %c0_i32_0 = arith.constant 0 : i32
    %2 = arith.cmpi ne, %1, %c0_i32_0 : i32
    scf.if %2 {
      %cst_12 = arith.constant 0.000000e+00 : f32
      %15 = vector.broadcast %cst_12 : f32 to vector<2x768xf32>
      %c0_13 = arith.constant 0 : index
      %c0_14 = arith.constant 0 : index
      %16 = vector.load %arg5[%c0_13, %c0_14] : memref<2x768xf32, #tpu.memory_space<vmem>>, vector<2x768xf32>
      tpu.vector_store %arg5[%c0_13, %c0_14], %15 {strides = array<i32>} : memref<2x768xf32, #tpu.memory_space<vmem>>, vector<2x768xf32>,
    } else {
    }
    %c0 = arith.constant 0 : index
    %c0_1 = arith.constant 0 : index
    %c0_2 = arith.constant 0 : index
    %3 = vector.load %arg2[%c0, %c0_1, %c0_2] : memref<2x8x768xbf16, #tpu.memory_space<vmem>>, vector<2x8x768xbf16>
    %c0_3 = arith.constant 0 : index
    %c0_4 = arith.constant 0 : index
    %c0_5 = arith.constant 0 : index
    %4 = vector.load %arg3[%c0_3, %c0_4, %c0_5] : memref<2x8x1xbf16, #tpu.memory_space<vmem>>, vector<2x8x1xbf16>
    %c0_6 = arith.constant 0 : index
    %c0_7 = arith.constant 0 : index
    %5 = vector.load %arg5[%c0_6, %c0_7] : memref<2x768xf32, #tpu.memory_space<vmem>>, vector<2x768xf32>
    %6 = vector.broadcast %4 : vector<2x8x1xbf16> to vector<2x8x768xbf16>
    %7 = arith.mulf %3, %6 : vector<2x8x768xbf16>
    %8 = arith.extf %7 : vector<2x8x768xbf16> to vector<2x8x768xf32>
    %cst = arith.constant dense<0.000000e+00> : vector<2x768xf32>
    %9 = vector.multi_reduction <add>, %8, %cst [1] : vector<2x8x768xf32> to vector<2x768xf32>
    %10 = arith.addf %5, %9 : vector<2x768xf32>
    %c0_8 = arith.constant 0 : index
    %c0_9 = arith.constant 0 : index
    %11 = vector.load %arg5[%c0_8, %c0_9] : memref<2x768xf32, #tpu.memory_space<vmem>>, vector<2x768xf32>
    tpu.vector_store %arg5[%c0_8, %c0_9], %10 {strides = array<i32>} : memref<2x768xf32, #tpu.memory_space<vmem>>, vector<2x768xf32>,
    %c0_i32_10 = arith.constant 0 : i32
    %12 = arith.cmpi eq, %arg1, %c0_i32_10 : i32
    %13 = arith.extui %12 : i1 to i32
    %c0_i32_11 = arith.constant 0 : i32
    %14 = arith.cmpi ne, %13, %c0_i32_11 : i32
    scf.if %14 {
      %c0_12 = arith.constant 0 : index
      %c0_13 = arith.constant 0 : index
      %15 = vector.load %arg5[%c0_12, %c0_13] : memref<2x768xf32, #tpu.memory_space<vmem>>, vector<2x768xf32>
      %c0_14 = arith.constant 0 : index
      %c0_15 = arith.constant 0 : index
      %16 = vector.load %arg4[%c0_14, %c0_15] : memref<2x768xf32, #tpu.memory_space<vmem>>, vector<2x768xf32>
      %17 = arith.mulf %15, %16 : vector<2x768xf32>
      %c0_16 = arith.constant 0 : index
      %c0_17 = arith.constant 0 : index
      %18 = vector.load %arg5[%c0_16, %c0_17] : memref<2x768xf32, #tpu.memory_space<vmem>>, vector<2x768xf32>
      tpu.vector_store %arg5[%c0_16, %c0_17], %17 {strides = array<i32>} : memref<2x768xf32, #tpu.memory_space<vmem>>, vector<2x768xf32>,
    } else {
    }
    return
  }
  func.func @transform_0(%arg0: i32, %arg1: i32) -> (i32, i32, i32) {
    %c0_i32 = arith.constant 0 : i32
    %c0_i32_0 = arith.constant 0 : i32
    return %arg0, %arg1, %c0_i32 : i32, i32, i32
  }
  func.func @transform_1(%arg0: i32, %arg1: i32) -> (i32, i32, i32) {
    %c0_i32 = arith.constant 0 : i32
    %c0_i32_0 = arith.constant 0 : i32
    return %arg0, %arg1, %c0_i32 : i32, i32, i32
  }
  func.func @transform_2(%arg0: i32, %arg1: i32) -> (i32, i32) {
    %c0_i32 = arith.constant 0 : i32
    %c0_i32_0 = arith.constant 0 : i32
    return %arg0, %c0_i32 : i32, i32
  }
  func.func @transform_3(%arg0: i32, %arg1: i32) -> (i32, i32) {
    %c0_i32 = arith.constant 0 : i32
    %c0_i32_0 = arith.constant 0 : i32
    return %arg0, %c0_i32 : i32, i32
  }
}

</mosaic_0001>

<llo_original>
// kernel: tpu_custom_call.1
$region0: #{tpu_custom_call.1}
  #allocation0 [shape = 'u32[]', space=smem, size = 0x4, offset = 0x4, fixed_abs, tag = 'smem constant byte address 0x4 - core index']
  #allocation1 [shape = 'u32[144,128]{1,0:T(1,128)}', space=vmem, size = 0x12000, scoped, tag = 'internal scratch']
  %s0 = inlined_call_operand.hbm [shape: bf16[2,8,768], index: 0, kind: input, shape index: {}]
  %s1 = inlined_call_operand.vmem [shape: bf16[2,8,1], index: 1, kind: input, shape index: {}]
  %s2 = inlined_call_operand.vmem [shape: f32[2,768], index: 2, kind: input, shape index: {}]
  %s3 = inlined_call_operand.hbm [shape: f32[2,768], index: 3, kind: output, shape index: {}]
  %s4 = sld [smem:[#allocation0]]
  $region34: #{tpu_custom_call.1} parent=0
    _
  %s6 = ssub.s32 1, %s4
  %s7 = scalar_select 0, %s6, %s4
  $region1: #{tpu_custom_call.1} parent=0
    #allocation2 [shape = 'u8[24576]{0}', space=vmem, size = 0x6000, scoped, tag = 'input window, operand 0, single buffered']
    #allocation3 [shape = 's32[1]{0}', space=sflag, size = 0x4, scoped, tag = 'scoped memory for tpu_custom_call.1']
    #allocation4 [shape = 's32[1]{0}', space=sflag, size = 0x4, scoped, tag = 'scoped memory for tpu_custom_call.1']
    #allocation5 [shape = 'u8[6144]{0}', space=vmem, size = 0x1800, scoped, tag = 'output window, operand 0, single buffered']
    %8 = vsyncpa [#allocation3], 0
    %9 = vsyncpa [#allocation4], 0
    // Predicated region
    $region2: #{tpu_custom_call.1} parent=1 // pred_check
      _
    $region3: #{tpu_custom_call.1} parent=1 // pred_check_branch
      %11 = sbr.rel (0) target = $region5
    $region4: #{tpu_custom_call.1} parent=1 // pred_region
      %s13 = ssub.s32 768, 768
      %14 = vsyncadd [#allocation3], %s13
      %s15 = sshll.u32 [#allocation2], 4
      %s16 = int_to_ptr.vmem [resolvable:$true] %s15
      %21 = dma.hbm_to_vmem [thread:$0]  %s0, 768, %s16, [#allocation3], 384, 384, 24
    $region5: #{tpu_custom_call.1} parent=1 // pred_fallthru
      _
    // Predicated region
    $region6: #{tpu_custom_call.1} parent=1 // pred_check
      _
    $region7: #{tpu_custom_call.1} parent=1 // pred_check_branch
      %23 = sbr.rel (0) target = $region9
    $region8: #{tpu_custom_call.1} parent=1 // pred_region
      _
    $region9: #{tpu_custom_call.1} parent=1 // pred_fallthru
      _
    // Predicated region
    $region10: #{tpu_custom_call.1} parent=1 // pred_check
      _
    $region11: #{tpu_custom_call.1} parent=1 // pred_check_branch
      %25 = sbr.rel (0) target = $region13
    $region12: #{tpu_custom_call.1} parent=1 // pred_region
      _
    $region13: #{tpu_custom_call.1} parent=1 // pred_fallthru
      _
    // Predicated region
    $region14: #{tpu_custom_call.1} parent=1 // pred_check
      _
    $region15: #{tpu_custom_call.1} parent=1 // pred_check_branch
      %27 = sbr.rel (0) target = $region17
    $region16: #{tpu_custom_call.1} parent=1 // pred_region
      %28 = dma.done [#allocation3], 768
    $region17: #{tpu_custom_call.1} parent=1 // pred_fallthru
      _
    %p29 = scmp.eq.s32.totalorder 0, 0
    // Predicated region
    $region18: #{tpu_custom_call.1} parent=1 // pred_check
      %p30 = pneg %p29
    $region19: #{tpu_custom_call.1} parent=1 // pred_check_branch
      %32 = sbr.rel (%p30) target = $region21
    $region20: #{tpu_custom_call.1} parent=1 // pred_region
      %33 = vst [vmem:[#allocation5] sm:$0xff] 0.0
      %34 = vst [vmem:[#allocation5 + $0x8] sm:$0xf] 0.0
    $region21: #{tpu_custom_call.1} parent=1 // pred_fallthru
      _
    %v35 = vld [vmem:[#allocation2] sm:$0xff]
    %v36 = vld [vmem:[#allocation2 + $0x8] sm:$0xff]
    %v37 = vld [vmem:[#allocation2 + $0x10] sm:$0xff]
    %v38 = vld [vmem:[#allocation2 + $0x18] sm:$0xff]
    %v39 = vld [vmem:[#allocation2 + $0x20] sm:$0xff]
    %v40 = vld [vmem:[#allocation2 + $0x28] sm:$0xff]
    %v41 = vld [vmem:[%s1] sm:$0xf]
    %v42 = vld [vmem:[%s1 + $0x4] sm:$0xf]
    %v43 = vld [vmem:[#allocation5] sm:$0xff]
    %v44 = vld [vmem:[#allocation5 + $0x8] sm:$0xf]
    %46 = vset.pattern.permute.xlu0 0
    %47 = vperm.xlu0 %46, %v41
    %v48 = vpop.permute.xlu0 %47
    %v51 = vunpack.c.l.s4 839922192
    %v52 = vunpack.c.0.s8 %v51
    %v53 = vlaneseq
    %v54 = vshrl.u32 %v53, 7
    %v55 = vsub.s32 %v52, %v54
    %v56 = vrot.slane %v48, %v55
    %58 = vset.pattern.permute.xlu0 0
    %59 = vperm.xlu0 %58, %v42
    %v60 = vpop.permute.xlu0 %59
    %v63 = vunpack.c.l.s4 839922192
    %v64 = vunpack.c.0.s8 %v63
    %v65 = vlaneseq
    %v66 = vshrl.u32 %v65, 7
    %v67 = vsub.s32 %v64, %v66
    %v68 = vrot.slane %v60, %v67
    %v69 = vmul.bf16 %v35, %v56
    %v70 = vmul.bf16 %v36, %v56
    %v71 = vmul.bf16 %v37, %v56
    %v72 = vmul.bf16 %v38, %v68
    %v73 = vmul.bf16 %v39, %v68
    %v74 = vmul.bf16 %v40, %v68
    %v75 = vunpack.c.l.bf16 %v69
    %v76 = vunpack.c.h.bf16 %v69
    %v77 = vunpack.c.l.bf16 %v70
    %v78 = vunpack.c.h.bf16 %v70
    %v79 = vunpack.c.l.bf16 %v71
    %v80 = vunpack.c.h.bf16 %v71
    %v81 = vunpack.c.l.bf16 %v72
    %v82 = vunpack.c.h.bf16 %v72
    %v83 = vunpack.c.l.bf16 %v73
    %v84 = vunpack.c.h.bf16 %v73
    %v85 = vunpack.c.l.bf16 %v74
    %v86 = vunpack.c.h.bf16 %v74
    %v87 = vrot.slane %v75, 4
    %v88 = vadd.f32 %v75, %v87
    %v89 = vrot.slane %v88, 2
    %v90 = vadd.f32 %v88, %v89
    %v91 = vrot.slane %v90, 1
    %v92 = vadd.f32 %v90, %v91
    %v93 = vrot.slane %v76, 4
    %v94 = vadd.f32 %v76, %v93
    %v95 = vrot.slane %v94, 2
    %v96 = vadd.f32 %v94, %v95
    %v97 = vrot.slane %v96, 1
    %v98 = vadd.f32 %v96, %v97
    %v99 = vrot.slane %v77, 4
    %v100 = vadd.f32 %v77, %v99
    %v101 = vrot.slane %v100, 2
    %v102 = vadd.f32 %v100, %v101
    %v103 = vrot.slane %v102, 1
    %v104 = vadd.f32 %v102, %v103
    %v105 = vrot.slane %v78, 4
    %v106 = vadd.f32 %v78, %v105
    %v107 = vrot.slane %v106, 2
    %v108 = vadd.f32 %v106, %v107
    %v109 = vrot.slane %v108, 1
    %v110 = vadd.f32 %v108, %v109
    %v111 = vrot.slane %v79, 4
    %v112 = vadd.f32 %v79, %v111
    %v113 = vrot.slane %v112, 2
    %v114 = vadd.f32 %v112, %v113
    %v115 = vrot.slane %v114, 1
    %v116 = vadd.f32 %v114, %v115
    %v117 = vrot.slane %v80, 4
    %v118 = vadd.f32 %v80, %v117
    %v119 = vrot.slane %v118, 2
    %v120 = vadd.f32 %v118, %v119
    %v121 = vrot.slane %v120, 1
    %v122 = vadd.f32 %v120, %v121
    %v123 = vrot.slane %v81, 4
    %v124 = vadd.f32 %v81, %v123
    %v125 = vrot.slane %v124, 2
    %v126 = vadd.f32 %v124, %v125
    %v127 = vrot.slane %v126, 1
    %v128 = vadd.f32 %v126, %v127
    %v129 = vrot.slane %v82, 4
    %v130 = vadd.f32 %v82, %v129
    %v131 = vrot.slane %v130, 2
    %v132 = vadd.f32 %v130, %v131
    %v133 = vrot.slane %v132, 1
    %v134 = vadd.f32 %v132, %v133
    %v135 = vrot.slane %v83, 4
    %v136 = vadd.f32 %v83, %v135
    %v137 = vrot.slane %v136, 2
    %v138 = vadd.f32 %v136, %v137
    %v139 = vrot.slane %v138, 1
    %v140 = vadd.f32 %v138, %v139
    %v141 = vrot.slane %v84, 4
    %v142 = vadd.f32 %v84, %v141
    %v143 = vrot.slane %v142, 2
    %v144 = vadd.f32 %v142, %v143
    %v145 = vrot.slane %v144, 1
    %v146 = vadd.f32 %v144, %v145
    %v147 = vrot.slane %v85, 4
    %v148 = vadd.f32 %v85, %v147
    %v149 = vrot.slane %v148, 2
    %v150 = vadd.f32 %v148, %v149
    %v151 = vrot.slane %v150, 1
    %v152 = vadd.f32 %v150, %v151
    %v153 = vrot.slane %v86, 4
    %v154 = vadd.f32 %v86, %v153
    %v155 = vrot.slane %v154, 2
    %v156 = vadd.f32 %v154, %v155
    %v157 = vrot.slane %v156, 1
    %v158 = vadd.f32 %v156, %v157
    %v171 = vcombine.low %v92, %v98
    %v172 = vcombine.low %v104, %v110
    %v174 = vunpack.c.l.s4 1983009808
    %v175 = vunpack.c.0.s8 %v174
    %v176 = vlaneseq
    %v177 = vshrl.u32 %v176, 7
    %v178 = vsub.s32 %v175, %v177
    %v179 = vrot.slane %v171, %v178
    %v181 = vunpack.c.l.s4 1983009808
    %v182 = vunpack.c.0.s8 %v181
    %v183 = vlaneseq
    %v184 = vshrl.u32 %v183, 7
    %v185 = vsub.s32 %v182, %v184
    %v186 = vrot.slane %v172, %v185
    %v187 = vcombine.low %v179, %v186
    %v188 = vcombine.low %v116, %v122
    %v190 = vunpack.c.l.s4 1983009808
    %v191 = vunpack.c.0.s8 %v190
    %v192 = vlaneseq
    %v193 = vshrl.u32 %v192, 7
    %v194 = vsub.s32 %v191, %v193
    %v195 = vrot.slane %v188, %v194
    %v196 = vcombine.low %v128, %v134
    %v197 = vcombine.low %v140, %v146
    %v199 = vunpack.c.l.s4 1983009808
    %v200 = vunpack.c.0.s8 %v199
    %v201 = vlaneseq
    %v202 = vshrl.u32 %v201, 7
    %v203 = vsub.s32 %v200, %v202
    %v204 = vrot.slane %v196, %v203
    %v206 = vunpack.c.l.s4 1983009808
    %v207 = vunpack.c.0.s8 %v206
    %v208 = vlaneseq
    %v209 = vshrl.u32 %v208, 7
    %v210 = vsub.s32 %v207, %v209
    %v211 = vrot.slane %v197, %v210
    %v212 = vcombine.low %v204, %v211
    %v213 = vcombine.low %v152, %v158
    %v215 = vunpack.c.l.s4 1983009808
    %v216 = vunpack.c.0.s8 %v215
    %v217 = vlaneseq
    %v218 = vshrl.u32 %v217, 7
    %v219 = vsub.s32 %v216, %v218
    %v220 = vrot.slane %v213, %v219
    %vm221 = vcmask 1044484
    %v222 = vsel %vm221, %v187, %v187
    %vm223 = vcmask 1046534
    %v224 = vsel %vm223, %v187, %v222
    %v225 = vrot.slane %v212, 7
    %vm226 = vcmask 1041409
    %v227 = vsel %vm226, %v225, %v224
    %vm228 = vcmask 1043459
    %v229 = vsel %vm228, %v225, %v227
    %vm230 = vcmask 1045509
    %v231 = vsel %vm230, %v225, %v229
    %vm232 = vcmask 1047559
    %v233 = vsel %vm232, %v225, %v231
    %v234 = vsel %vm221, %v195, %v195
    %v235 = vsel %vm223, %v195, %v234
    %v236 = vrot.slane %v220, 7
    %v237 = vsel %vm226, %v236, %v235
    %v238 = vsel %vm228, %v236, %v237
    %v239 = vsel %vm230, %v236, %v238
    %v240 = vsel %vm232, %v236, %v239
    %v243 = vadd.f32 %v43, %v233
    %v244 = vadd.f32 %v44, %v240
    %245 = vst [vmem:[#allocation5] sm:$0xff] %v243
    %246 = vst [vmem:[#allocation5 + $0x8] sm:$0xf] %v244
    // Predicated region
    $region22: #{tpu_custom_call.1} parent=1 // pred_check
      %p247 = pneg %p29
    $region23: #{tpu_custom_call.1} parent=1 // pred_check_branch
      %249 = sbr.rel (%p247) target = $region25
    $region24: #{tpu_custom_call.1} parent=1 // pred_region
      %v250 = vld [vmem:[#allocation5] sm:$0xff]
      %v251 = vld [vmem:[#allocation5 + $0x8] sm:$0xf]
      %v252 = vld [vmem:[%s2] sm:$0xff]
      %v253 = vld [vmem:[%s2 + $0x8] sm:$0xf]
      %v254 = vmul.f32 %v250, %v252
      %v255 = vmul.f32 %v251, %v253
      %256 = vst [vmem:[#allocation5] sm:$0xff] %v254
      %257 = vst [vmem:[#allocation5 + $0x8] sm:$0xf] %v255
    $region25: #{tpu_custom_call.1} parent=1 // pred_fallthru
      _
    // Predicated region
    $region26: #{tpu_custom_call.1} parent=1 // pred_check
      _
    $region27: #{tpu_custom_call.1} parent=1 // pred_check_branch
      %259 = sbr.rel (0) target = $region29
    $region28: #{tpu_custom_call.1} parent=1 // pred_region
      %s261 = ssub.s32 192, 192
      %262 = vsyncadd [#allocation4], %s261
      %s264 = sshll.u32 [#allocation5], 4
      %s265 = int_to_ptr.vmem [resolvable:$true] %s264
      %267 = dma.vmem_to_hbm [thread:$0]  %s265, 192, %s3, [#allocation4]
    $region29: #{tpu_custom_call.1} parent=1 // pred_fallthru
      _
    // Predicated region
    $region30: #{tpu_custom_call.1} parent=1 // pred_check
      _
    $region31: #{tpu_custom_call.1} parent=1 // pred_check_branch
      %269 = sbr.rel (0) target = $region33
    $region32: #{tpu_custom_call.1} parent=1 // pred_region
      %270 = dma.done [#allocation4], 192
    $region33: #{tpu_custom_call.1} parent=1 // pred_fallthru
      _
    %271 = vsyncpa [#allocation3], 1
    %272 = vsyncpa [#allocation4], 1

</llo_original>
